<compile_context>
chip_gen: v5e
topology: v5e:2x2
jax: 0.10.0
libtpu: 0.0.40
codegen_flags: <defaults>
</compile_context>

<pallas_src>
import numpy as np
import jax
import jax.numpy as jnp
from jax.experimental import pallas as pl
from jax.experimental.pallas import tpu as pltpu

SQRT_HALF = 0.7071067811865476
LANE = 128
SUBLANE = 8


def _ceil_to(v, m):
    return ((v + m - 1) // m) * m


# ----------------------------- in-kernel GELU (exact-erf form) -----------------------------
def _erf_approx(x):
    # Abramowitz & Stegun 7.1.26 (|abs err| < 1.5e-7).
    # TODO(synk): switch to lax.erf if/when erf_p gets a Mosaic lowering rule.
    p = 0.3275911
    a1, a2, a3, a4, a5 = 0.254829592, -0.284496736, 1.421413741, -1.453152027, 1.061405429
    ax = jnp.abs(x)
    t = pl.reciprocal(1.0 + p * ax, approx=True)      # EUP reciprocal, not a VALU divide
    poly = ((((a5 * t + a4) * t + a3) * t + a2) * t + a1) * t
    y = 1.0 - poly * jnp.exp(-ax * ax)
    return jnp.where(x >= 0, y, -y)


def _gelu(x):
    # nn.GELU() default = exact erf-based GELU; gelu(0) == 0 so padded lanes stay zero.
    return 0.5 * x * (1.0 + _erf_approx(x * SQRT_HALF))


# --------------------------- host-side folded resident operators ---------------------------
def build_fused_operators(N, C, M, P, F, spec_weights, w0, b0, w1, b1, w2, b2,
                          *, matmul_dtype=jnp.float32):
    """Fold the whole FourierModel forward into dense VMEM-resident operators.

      fc0 + permute + conv1(block 0)                -> K0   (TPp, CNp) + bias (1, CNp)
      each remaining SpectralConv1d (rfft.mix.irfft) -> Ks   (n_convs-1, CNp, CNp)
      permute back + fc1                            -> W1b  (CNp, TFp) + bias (1, TFp)
      fc2                                           -> W2b  (TFp, TPp) + bias (1, TPp)

    spec_weights: complex (C, C, M) SpectralConv1d weights in conv order
    (conv1_blk0, conv2_blk0, conv1_blk1, ...); requires >= 2 (i.e. layer >= 2).
    All padding (rows to CNp/TFp, output lanes to 128 multiples) is zero, so padded lanes of
    the activations remain exactly zero through every layer.
    """
    assert len(spec_weights) >= 2, "need at least one ResNetBasicBlock (two convs)"
    T = N                                   # the permute maps the time axis onto the conv axis
    CN = C * N
    CNp = _ceil_to(CN, LANE)
    TP, TF = T * P, T * F
    TPp = _ceil_to(TP, LANE)
    TFp = _ceil_to(TF, LANE)

    # truncated rDFT / irDFT (backward norm) matrices, float64 for the fold accuracy
    n = np.arange(N, dtype=np.float64)
    k = np.arange(M, dtype=np.float64)
    ang = 2.0 * np.pi * np.outer(n, k) / N                     # (N, M)
    Fr, Fi = np.cos(ang), -np.sin(ang)                          # xr = x @ Fr ; xi = x @ Fi
    # irfft (backward norm): imaginary DC / Nyquist contributions vanish (sin rows are 0)
    ck = np.where((np.arange(M) == 0) | (np.arange(M) == N // 2), 1.0, 2.0)
    Gr = (ck[:, None] / N) * np.cos(ang.T)                      # (M, N)
    Gi = -(ck[:, None] / N) * np.sin(ang.T)                     # (M, N)

    # per-conv operator: rfft -> complex channel mixing -> irfft folded into one (CN, CN) map
    k_ops = []
    for w in spec_weights:
        Wr = np.real(w).astype(np.float64)                      # (C_in, C_out, M)
        Wi = np.imag(w).astype(np.float64)
        Ar = (np.einsum('iom,mn->imon', Wr, Gr)
              + np.einsum('iom,mn->imon', Wi, Gi)).reshape(C, M, CN)
        Ai = (np.einsum('iom,mn->imon', Wr, Gi)
              - np.einsum('iom,mn->imon', Wi, Gr)).reshape(C, M, CN)
        K = (np.einsum('nm,imq->inq', Fr, Ar)
             + np.einsum('nm,imq->inq', Fi, Ai)).reshape(CN, CN)
        k_ops.append(np.pad(K, ((0, 0), (0, CNp - CN))))        # lane-dense output columns

    eyeT = np.eye(T, dtype=np.float64)

    # fc0 + permute folded into conv #0 (fc0 is linear with no activation before conv1)
    w0n, b0n = np.asarray(w0, np.float64), np.asarray(b0, np.float64).reshape(-1)
    W0_big = np.einsum('pc,tu->tpcu', w0n, eyeT).reshape(TP, CN)    # row t*P+p -> col c*N+t
    K0 = np.pad(W0_big @ k_ops[0], ((0, TPp - TP), (0, 0)))         # (TPp, CNp)
    bias0 = (np.repeat(b0n, N) @ k_ops[0]).reshape(1, CNp)

    Ks = np.stack([np.pad(kop, ((0, CNp - CN), (0, 0))) for kop in k_ops[1:]])  # (n-1,CNp,CNp)

    # permute back + fc1 / fc2 as block-diagonal (per time step) resident operators
    w1n, b1n = np.asarray(w1, np.float64), np.asarray(b1, np.float64).reshape(-1)
    w2n, b2n = np.asarray(w2, np.float64), np.asarray(b2, np.float64).reshape(-1)
    W1b = np.einsum('cf,tu->ctuf', w1n, eyeT).reshape(CN, TF)       # row c*N+t -> col t*F+f
    W1b = np.pad(W1b, ((0, CNp - CN), (0, TFp - TF)))
    b1b = np.pad(np.tile(b1n, T), (0, TFp - TF)).reshape(1, TFp)
    W2b = np.einsum('fp,tu->tfup', w2n, eyeT).reshape(TF, TP)       # row t*F+f -> col t*P+p
    W2b = np.pad(W2b, ((0, TFp - TF), (0, TPp - TP)))
    b2b = np.pad(np.tile(b2n, T), (0, TPp - TP)).reshape(1, TPp)

    mm = lambda a: jnp.asarray(np.asarray(a, np.float32)).astype(matmul_dtype)  # pre-cast ops
    f32 = lambda a: jnp.asarray(np.asarray(a, np.float32))
    return (mm(K0), f32(bias0), mm(Ks), mm(W1b), f32(b1b), mm(W2b), f32(b2b))


# ------------------------------------- fused forward pass ----------------------------------
def fourier_model_forward(x, ops, *, batch_tile=1024, matmul_dtype=jnp.float32):
    """FourierModel.forward as one batch-tiled pallas_call over resident operators."""
    k0, b0f, ks, w1b, b1f, w2b, b2f = ops
    B, T, P = x.shape
    TPp, CNp = k0.shape
    n_rest = ks.shape[0]
    TFp = w1b.shape[1]
    TP = T * P

    # batch tiling: sublane-aligned rows; >=2 "parallel" grid steps when possible so the
    # second TensorCore on v7x gets work (megacore sharding).
    BPmin = _ceil_to(B, SUBLANE)
    if BPmin // batch_tile >= 2:
        BT = batch_tile
    else:
        BT = max(_ceil_to(BPmin // 2, SUBLANE), SUBLANE)
    BT = min(BT, BPmin)
    BP = _ceil_to(BPmin, BT)

    # zero-pad rows to the batch tile and lanes to 128; padded lanes stay zero throughout.
    x2 = jnp.pad(x.reshape(B, TP).astype(jnp.float32), ((0, BP - B), (0, TPp - TP)))

    def dot32(a, b):
        # operators are pre-cast on the host; bf16 is the v6e/v7x MXU fast path, acc stays f32
        return jnp.dot(a.astype(matmul_dtype), b, preferred_element_type=jnp.float32)

    def kernel(x_ref, k0_ref, b0_ref, ks_ref, w1_ref, b1_ref, w2_ref, b2_ref, o_ref):
        # fc0 + permute + conv1(block 0) folded into one matmul, then GELU
        h = _gelu(dot32(x_ref[...], k0_ref[...]) + b0_ref[...])          # (BT, CNp)
        # remaining spectral convs: one lane-dense matmul each (rfft.mix.irfft folded)
        for j in range(n_rest):
            h = _gelu(dot32(h, ks_ref[j]))                               # (BT, CNp)
        # permute back + fc1, GELU, fc2 (block-diagonal resident operators), lane-dense store
        z = _gelu(dot32(h, w1_ref[...]) + b1_ref[...])                   # (BT, TFp)
        o_ref[...] = dot32(z, w2_ref[...]) + b2_ref[...]                 # (BT, TPp)

    n_convs = n_rest + 1
    op_bytes = sum(int(a.size) * a.dtype.itemsize for a in ops)
    cost = pl.CostEstimate(
        flops=int(2 * BP * (TPp * CNp + n_rest * CNp * CNp + CNp * TFp + TFp * TPp)),
        transcendentals=int(2 * BP * (n_convs * CNp + TFp)),   # exp + approx-recip per GELU elem
        bytes_accessed=int(4 * BP * (TPp + TPp) + op_bytes),
    )
    # tight VMEM budget: resident operators (x2 for pipeline buffers) + double-buffered
    # in/out blocks + intermediates + small slack; capped at 48 MiB (v7x has 64 MiB VMEM).
    io_bytes = 2 * 4 * BT * (TPp + TPp)
    interm_bytes = 2 * 4 * BT * (CNp + TFp)
    vmem_budget = int(min(2 * op_bytes + io_bytes + interm_bytes + (4 << 20), 48 << 20))

    out = pl.pallas_call(
        kernel,
        out_shape=jax.ShapeDtypeStruct((BP, TPp), jnp.float32),
        grid=(BP // BT,),
        in_specs=[
            pl.BlockSpec((BT, TPp), lambda i: (i, 0)),
            pl.BlockSpec(k0.shape, lambda i: (0, 0)),            # resident across grid steps
            pl.BlockSpec(b0f.shape, lambda i: (0, 0)),
            pl.BlockSpec(ks.shape, lambda i: (0, 0, 0)),
            pl.BlockSpec(w1b.shape, lambda i: (0, 0)),
            pl.BlockSpec(b1f.shape, lambda i: (0, 0)),
            pl.BlockSpec(w2b.shape, lambda i: (0, 0)),
            pl.BlockSpec(b2f.shape, lambda i: (0, 0)),
        ],
        out_specs=pl.BlockSpec((BT, TPp), lambda i: (i, 0)),
        compiler_params=pltpu.CompilerParams(
            dimension_semantics=("parallel",),
            vmem_limit_bytes=vmem_budget),
        cost_estimate=cost,
    )(x2, k0, b0f, ks, w1b, b1f, w2b, b2f)
    # single slice/reshape at the very end of the whole pipeline
    return out[:B, :TP].reshape(B, T, P)


# --------------------------- pure-JAX reference (torch semantics) --------------------------
def _gelu_exact(x):
    return 0.5 * x * (1.0 + jax.scipy.special.erf(x * SQRT_HALF))


def _spectral_ref(x, w, modes):
    B, C, N = x.shape
    x_ft = jnp.fft.rfft(x)
    mul = jnp.einsum('bix,iox->box', x_ft[:, :, :modes], w.astype(jnp.complex64))
    out_ft = jnp.zeros((B, C, N // 2 + 1), jnp.complex64).at[:, :, :modes].set(mul)
    return jnp.fft.irfft(out_ft, n=N).astype(jnp.float32)


def _fourier_model_ref(x, w0, b0, spec_ws, w1, b1, w2, b2, modes):
    h = x @ w0 + b0
    h = jnp.transpose(h, (0, 2, 1))
    for i in range(0, len(spec_ws), 2):                 # each block: conv, gelu, conv, gelu
        h = _gelu_exact(_spectral_ref(h, spec_ws[i], modes))
        h = _gelu_exact(_spectral_ref(h, spec_ws[i + 1], modes))
    h = jnp.transpose(h, (0, 2, 1))
    h = _gelu_exact(h @ w1 + b1)
    return h @ w2 + b2


if __name__ == "__main__":
    # config: prob_dim=2 (u, v), width=4, T_N=16, modes=5, fc_map_dim=32, layer=4 -> 2 blocks
    B, T_N, P = 2, 16, 2
    C, M, F = 4, 5, 32
    LAYERS = 4
    n_blocks = LAYERS // 2

    key = jax.random.PRNGKey(0)
    keys = jax.random.split(key, 16)

    def uni(k, shape, lim):
        return jax.random.uniform(k, shape, jnp.float32, -lim, lim)

    # fc params (stored as (in, out) so the math is x @ W + b; same as torch Linear)
    w0 = uni(keys[0], (P, C), 1.0 / np.sqrt(P)); b0 = uni(keys[1], (1, C), 1.0 / np.sqrt(P))
    w1 = uni(keys[2], (C, F), 1.0 / np.sqrt(C)); b1 = uni(keys[3], (1, F), 1.0 / np.sqrt(C))
    w2 = uni(keys[4], (F, P), 1.0 / np.sqrt(F)); b2 = uni(keys[5], (1, P), 1.0 / np.sqrt(F))

    # SpectralConv1d weights: scale * rand(C, C, M, dtype=cfloat), two per ResNet block
    scale = 1.0 / (C * C)
    spec_ws = []
    for j in range(2 * n_blocks):
        kr, ki = jax.random.split(keys[6 + j])
        re = np.asarray(jax.random.uniform(kr, (C, C, M), jnp.float32), dtype=np.float64)
        im = np.asarray(jax.random.uniform(ki, (C, C, M), jnp.float32), dtype=np.float64)
        spec_ws.append(scale * (re + 1j * im))

    # matmul_dtype=jnp.bfloat16 enables the v6e/v7x MXU fast path (loosen tolerance then);
    # kept f32 here so the numerical check is architecture independent.
    mm_dtype = jnp.float32
    ops = build_fused_operators(T_N, C, M, P, F, spec_ws, w0, b0, w1, b1, w2, b2,
                                matmul_dtype=mm_dtype)

    x = jax.random.normal(keys[12], (B, T_N, P), jnp.float32)

    y = fourier_model_forward(x, ops, matmul_dtype=mm_dtype)
    y = jax.block_until_ready(y)

    spec_ws_j = [jnp.asarray(w.astype(np.complex64)) for w in spec_ws]
    y_ref = _fourier_model_ref(x, w0, b0, spec_ws_j, w1, b1, w2, b2, M)
    # tolerance absorbs the A&S erf approximation + EUP approx reciprocal vs exact-erf ref
    np.testing.assert_allclose(np.asarray(y), np.asarray(y_ref), rtol=2e-3, atol=2e-3)

    print("KERNEL_OK")
</pallas_src>

<mosaic_0001>
module attributes {stable_mosaic.version = 11 : i64} {
  func.func @kernel(%arg0: i32, %arg1: memref<8x128xf32, #tpu.memory_space<vmem>>, %arg2: memref<128x128xf32, #tpu.memory_space<vmem>>, %arg3: memref<1x128xf32, #tpu.memory_space<vmem>>, %arg4: memref<3x128x128xf32, #tpu.memory_space<vmem>>, %arg5: memref<128x512xf32, #tpu.memory_space<vmem>>, %arg6: memref<1x512xf32, #tpu.memory_space<vmem>>, %arg7: memref<512x128xf32, #tpu.memory_space<vmem>>, %arg8: memref<1x128xf32, #tpu.memory_space<vmem>>, %arg9: memref<8x128xf32, #tpu.memory_space<vmem>>) attributes {dimension_semantics = [#tpu.dimension_semantics<parallel>], iteration_bounds = array<i64: 1>, scalar_prefetch = 0 : i64, scratch_operands = 0 : i64, tpu.core_type = #tpu.core_type<tc>, window_params = [{transform_indices = @transform_0, window_bounds = array<i64: 8, 128>}, {pipeline_mode = #tpu.pipeline_mode<synchronous>, transform_indices = @transform_1, window_bounds = array<i64: 128, 128>}, {pipeline_mode = #tpu.pipeline_mode<synchronous>, transform_indices = @transform_2, window_bounds = array<i64: 1, 128>}, {pipeline_mode = #tpu.pipeline_mode<synchronous>, transform_indices = @transform_3, window_bounds = array<i64: 3, 128, 128>}, {pipeline_mode = #tpu.pipeline_mode<synchronous>, transform_indices = @transform_4, window_bounds = array<i64: 128, 512>}, {pipeline_mode = #tpu.pipeline_mode<synchronous>, transform_indices = @transform_5, window_bounds = array<i64: 1, 512>}, {pipeline_mode = #tpu.pipeline_mode<synchronous>, transform_indices = @transform_6, window_bounds = array<i64: 512, 128>}, {pipeline_mode = #tpu.pipeline_mode<synchronous>, transform_indices = @transform_7, window_bounds = array<i64: 1, 128>}, {transform_indices = @transform_8, window_bounds = array<i64: 8, 128>}]} {
    %c0 = arith.constant 0 : index
    %c0_0 = arith.constant 0 : index
    %0 = vector.load %arg1[%c0, %c0_0] : memref<8x128xf32, #tpu.memory_space<vmem>>, vector<8x128xf32>
    %c0_1 = arith.constant 0 : index
    %c0_2 = arith.constant 0 : index
    %1 = vector.load %arg2[%c0_1, %c0_2] : memref<128x128xf32, #tpu.memory_space<vmem>>, vector<128x128xf32>
    %cst = arith.constant dense<0.000000e+00> : vector<8x128xf32>
    %2 = tpu.matmul %0, %1, %cst {dimension_numbers = #tpu.dot_dimension_numbers<[1], [0], [0], [1], [0, 0, 1, 1], [], []>} : vector<8x128xf32>, vector<128x128xf32>, vector<8x128xf32> -> vector<8x128xf32>
    %c0_3 = arith.constant 0 : index
    %c0_4 = arith.constant 0 : index
    %3 = vector.load %arg3[%c0_3, %c0_4] : memref<1x128xf32, #tpu.memory_space<vmem>>, vector<1x128xf32>
    %4 = vector.broadcast %3 : vector<1x128xf32> to vector<8x128xf32>
    %5 = arith.addf %2, %4 : vector<8x128xf32>
    %cst_5 = arith.constant 5.000000e-01 : f32
    %6 = vector.broadcast %cst_5 : f32 to vector<8x128xf32>
    %7 = arith.mulf %6, %5 : vector<8x128xf32>
    %cst_6 = arith.constant 0.707106769 : f32
    %8 = vector.broadcast %cst_6 : f32 to vector<8x128xf32>
    %9 = arith.mulf %5, %8 : vector<8x128xf32>
    %10 = math.absf %9 : vector<8x128xf32>
    %cst_7 = arith.constant 0.327591091 : f32
    %11 = vector.broadcast %cst_7 : f32 to vector<8x128xf32>
    %12 = arith.mulf %11, %10 : vector<8x128xf32>
    %cst_8 = arith.constant 1.000000e+00 : f32
    %13 = vector.broadcast %cst_8 : f32 to vector<8x128xf32>
    %14 = arith.addf %13, %12 : vector<8x128xf32>
    %15 = tpu.reciprocal %14 {approx = true} : vector<8x128xf32> -> vector<8x128xf32>
    %cst_9 = arith.constant 1.06140542 : f32
    %16 = vector.broadcast %cst_9 : f32 to vector<8x128xf32>
    %17 = arith.mulf %16, %15 : vector<8x128xf32>
    %cst_10 = arith.constant -1.45315206 : f32
    %18 = vector.broadcast %cst_10 : f32 to vector<8x128xf32>
    %19 = arith.addf %17, %18 : vector<8x128xf32>
    %20 = arith.mulf %19, %15 : vector<8x128xf32>
    %cst_11 = arith.constant 1.42141378 : f32
    %21 = vector.broadcast %cst_11 : f32 to vector<8x128xf32>
    %22 = arith.addf %20, %21 : vector<8x128xf32>
    %23 = arith.mulf %22, %15 : vector<8x128xf32>
    %cst_12 = arith.constant -0.284496725 : f32
    %24 = vector.broadcast %cst_12 : f32 to vector<8x128xf32>
    %25 = arith.addf %23, %24 : vector<8x128xf32>
    %26 = arith.mulf %25, %15 : vector<8x128xf32>
    %cst_13 = arith.constant 0.254829586 : f32
    %27 = vector.broadcast %cst_13 : f32 to vector<8x128xf32>
    %28 = arith.addf %26, %27 : vector<8x128xf32>
    %29 = arith.mulf %28, %15 : vector<8x128xf32>
    %cst_14 = arith.constant 0.000000e+00 : f32
    %30 = vector.broadcast %cst_14 : f32 to vector<8x128xf32>
    %31 = arith.subf %30, %10 : vector<8x128xf32>
    %32 = arith.mulf %31, %10 : vector<8x128xf32>
    %33 = math.exp %32 : vector<8x128xf32>
    %34 = arith.mulf %29, %33 : vector<8x128xf32>
    %cst_15 = arith.constant 1.000000e+00 : f32
    %35 = vector.broadcast %cst_15 : f32 to vector<8x128xf32>
    %36 = arith.subf %35, %34 : vector<8x128xf32>
    %cst_16 = arith.constant 0.000000e+00 : f32
    %37 = vector.broadcast %cst_16 : f32 to vector<8x128xf32>
    %38 = arith.cmpf oge, %9, %37 : vector<8x128xf32>
    %cst_17 = arith.constant 0.000000e+00 : f32
    %39 = vector.broadcast %cst_17 : f32 to vector<8x128xf32>
    %40 = arith.subf %39, %36 : vector<8x128xf32>
    %41 = arith.select %38, %36, %40 : vector<8x128xi1>, vector<8x128xf32>
    %cst_18 = arith.constant 1.000000e+00 : f32
    %42 = vector.broadcast %cst_18 : f32 to vector<8x128xf32>
    %43 = arith.addf %42, %41 : vector<8x128xf32>
    %44 = arith.mulf %7, %43 : vector<8x128xf32>
    %c0_19 = arith.constant 0 : index
    %c0_20 = arith.constant 0 : index
    %c0_21 = arith.constant 0 : index
    %45 = vector.load %arg4[%c0_19, %c0_20, %c0_21] : memref<3x128x128xf32, #tpu.memory_space<vmem>>, vector<1x128x128xf32>
    %46 = vector.shape_cast %45 : vector<1x128x128xf32> to vector<128x128xf32>
    %cst_22 = arith.constant dense<0.000000e+00> : vector<8x128xf32>
    %47 = tpu.matmul %44, %46, %cst_22 {dimension_numbers = #tpu.dot_dimension_numbers<[1], [0], [0], [1], [0, 0, 1, 1], [], []>} : vector<8x128xf32>, vector<128x128xf32>, vector<8x128xf32> -> vector<8x128xf32>
    %cst_23 = arith.constant 5.000000e-01 : f32
    %48 = vector.broadcast %cst_23 : f32 to vector<8x128xf32>
    %49 = arith.mulf %48, %47 : vector<8x128xf32>
    %cst_24 = arith.constant 0.707106769 : f32
    %50 = vector.broadcast %cst_24 : f32 to vector<8x128xf32>
    %51 = arith.mulf %47, %50 : vector<8x128xf32>
    %52 = math.absf %51 : vector<8x128xf32>
    %cst_25 = arith.constant 0.327591091 : f32
    %53 = vector.broadcast %cst_25 : f32 to vector<8x128xf32>
    %54 = arith.mulf %53, %52 : vector<8x128xf32>
    %cst_26 = arith.constant 1.000000e+00 : f32
    %55 = vector.broadcast %cst_26 : f32 to vector<8x128xf32>
    %56 = arith.addf %55, %54 : vector<8x128xf32>
    %57 = tpu.reciprocal %56 {approx = true} : vector<8x128xf32> -> vector<8x128xf32>
    %cst_27 = arith.constant 1.06140542 : f32
    %58 = vector.broadcast %cst_27 : f32 to vector<8x128xf32>
    %59 = arith.mulf %58, %57 : vector<8x128xf32>
    %cst_28 = arith.constant -1.45315206 : f32
    %60 = vector.broadcast %cst_28 : f32 to vector<8x128xf32>
    %61 = arith.addf %59, %60 : vector<8x128xf32>
    %62 = arith.mulf %61, %57 : vector<8x128xf32>
    %cst_29 = arith.constant 1.42141378 : f32
    %63 = vector.broadcast %cst_29 : f32 to vector<8x128xf32>
    %64 = arith.addf %62, %63 : vector<8x128xf32>
    %65 = arith.mulf %64, %57 : vector<8x128xf32>
    %cst_30 = arith.constant -0.284496725 : f32
    %66 = vector.broadcast %cst_30 : f32 to vector<8x128xf32>
    %67 = arith.addf %65, %66 : vector<8x128xf32>
    %68 = arith.mulf %67, %57 : vector<8x128xf32>
    %cst_31 = arith.constant 0.254829586 : f32
    %69 = vector.broadcast %cst_31 : f32 to vector<8x128xf32>
    %70 = arith.addf %68, %69 : vector<8x128xf32>
    %71 = arith.mulf %70, %57 : vector<8x128xf32>
    %cst_32 = arith.constant 0.000000e+00 : f32
    %72 = vector.broadcast %cst_32 : f32 to vector<8x128xf32>
    %73 = arith.subf %72, %52 : vector<8x128xf32>
    %74 = arith.mulf %73, %52 : vector<8x128xf32>
    %75 = math.exp %74 : vector<8x128xf32>
    %76 = arith.mulf %71, %75 : vector<8x128xf32>
    %cst_33 = arith.constant 1.000000e+00 : f32
    %77 = vector.broadcast %cst_33 : f32 to vector<8x128xf32>
    %78 = arith.subf %77, %76 : vector<8x128xf32>
    %cst_34 = arith.constant 0.000000e+00 : f32
    %79 = vector.broadcast %cst_34 : f32 to vector<8x128xf32>
    %80 = arith.cmpf oge, %51, %79 : vector<8x128xf32>
    %cst_35 = arith.constant 0.000000e+00 : f32
    %81 = vector.broadcast %cst_35 : f32 to vector<8x128xf32>
    %82 = arith.subf %81, %78 : vector<8x128xf32>
    %83 = arith.select %80, %78, %82 : vector<8x128xi1>, vector<8x128xf32>
    %cst_36 = arith.constant 1.000000e+00 : f32
    %84 = vector.broadcast %cst_36 : f32 to vector<8x128xf32>
    %85 = arith.addf %84, %83 : vector<8x128xf32>
    %86 = arith.mulf %49, %85 : vector<8x128xf32>
    %c1 = arith.constant 1 : index
    %c0_37 = arith.constant 0 : index
    %c0_38 = arith.constant 0 : index
    %87 = vector.load %arg4[%c1, %c0_37, %c0_38] : memref<3x128x128xf32, #tpu.memory_space<vmem>>, vector<1x128x128xf32>
    %88 = vector.shape_cast %87 : vector<1x128x128xf32> to vector<128x128xf32>
    %cst_39 = arith.constant dense<0.000000e+00> : vector<8x128xf32>
    %89 = tpu.matmul %86, %88, %cst_39 {dimension_numbers = #tpu.dot_dimension_numbers<[1], [0], [0], [1], [0, 0, 1, 1], [], []>} : vector<8x128xf32>, vector<128x128xf32>, vector<8x128xf32> -> vector<8x128xf32>
    %cst_40 = arith.constant 5.000000e-01 : f32
    %90 = vector.broadcast %cst_40 : f32 to vector<8x128xf32>
    %91 = arith.mulf %90, %89 : vector<8x128xf32>
    %cst_41 = arith.constant 0.707106769 : f32
    %92 = vector.broadcast %cst_41 : f32 to vector<8x128xf32>
    %93 = arith.mulf %89, %92 : vector<8x128xf32>
    %94 = math.absf %93 : vector<8x128xf32>
    %cst_42 = arith.constant 0.327591091 : f32
    %95 = vector.broadcast %cst_42 : f32 to vector<8x128xf32>
    %96 = arith.mulf %95, %94 : vector<8x128xf32>
    %cst_43 = arith.constant 1.000000e+00 : f32
    %97 = vector.broadcast %cst_43 : f32 to vector<8x128xf32>
    %98 = arith.addf %97, %96 : vector<8x128xf32>
    %99 = tpu.reciprocal %98 {approx = true} : vector<8x128xf32> -> vector<8x128xf32>
    %cst_44 = arith.constant 1.06140542 : f32
    %100 = vector.broadcast %cst_44 : f32 to vector<8x128xf32>
    %101 = arith.mulf %100, %99 : vector<8x128xf32>
    %cst_45 = arith.constant -1.45315206 : f32
    %102 = vector.broadcast %cst_45 : f32 to vector<8x128xf32>
    %103 = arith.addf %101, %102 : vector<8x128xf32>
    %104 = arith.mulf %103, %99 : vector<8x128xf32>
    %cst_46 = arith.constant 1.42141378 : f32
    %105 = vector.broadcast %cst_46 : f32 to vector<8x128xf32>
    %106 = arith.addf %104, %105 : vector<8x128xf32>
    %107 = arith.mulf %106, %99 : vector<8x128xf32>
    %cst_47 = arith.constant -0.284496725 : f32
    %108 = vector.broadcast %cst_47 : f32 to vector<8x128xf32>
    %109 = arith.addf %107, %108 : vector<8x128xf32>
    %110 = arith.mulf %109, %99 : vector<8x128xf32>
    %cst_48 = arith.constant 0.254829586 : f32
    %111 = vector.broadcast %cst_48 : f32 to vector<8x128xf32>
    %112 = arith.addf %110, %111 : vector<8x128xf32>
    %113 = arith.mulf %112, %99 : vector<8x128xf32>
    %cst_49 = arith.constant 0.000000e+00 : f32
    %114 = vector.broadcast %cst_49 : f32 to vector<8x128xf32>
    %115 = arith.subf %114, %94 : vector<8x128xf32>
    %116 = arith.mulf %115, %94 : vector<8x128xf32>
    %117 = math.exp %116 : vector<8x128xf32>
    %118 = arith.mulf %113, %117 : vector<8x128xf32>
    %cst_50 = arith.constant 1.000000e+00 : f32
    %119 = vector.broadcast %cst_50 : f32 to vector<8x128xf32>
    %120 = arith.subf %119, %118 : vector<8x128xf32>
    %cst_51 = arith.constant 0.000000e+00 : f32
    %121 = vector.broadcast %cst_51 : f32 to vector<8x128xf32>
    %122 = arith.cmpf oge, %93, %121 : vector<8x128xf32>
    %cst_52 = arith.constant 0.000000e+00 : f32
    %123 = vector.broadcast %cst_52 : f32 to vector<8x128xf32>
    %124 = arith.subf %123, %120 : vector<8x128xf32>
    %125 = arith.select %122, %120, %124 : vector<8x128xi1>, vector<8x128xf32>
    %cst_53 = arith.constant 1.000000e+00 : f32
    %126 = vector.broadcast %cst_53 : f32 to vector<8x128xf32>
    %127 = arith.addf %126, %125 : vector<8x128xf32>
    %128 = arith.mulf %91, %127 : vector<8x128xf32>
    %c2 = arith.constant 2 : index
    %c0_54 = arith.constant 0 : index
    %c0_55 = arith.constant 0 : index
    %129 = vector.load %arg4[%c2, %c0_54, %c0_55] : memref<3x128x128xf32, #tpu.memory_space<vmem>>, vector<1x128x128xf32>
    %130 = vector.shape_cast %129 : vector<1x128x128xf32> to vector<128x128xf32>
    %cst_56 = arith.constant dense<0.000000e+00> : vector<8x128xf32>
    %131 = tpu.matmul %128, %130, %cst_56 {dimension_numbers = #tpu.dot_dimension_numbers<[1], [0], [0], [1], [0, 0, 1, 1], [], []>} : vector<8x128xf32>, vector<128x128xf32>, vector<8x128xf32> -> vector<8x128xf32>
    %cst_57 = arith.constant 5.000000e-01 : f32
    %132 = vector.broadcast %cst_57 : f32 to vector<8x128xf32>
    %133 = arith.mulf %132, %131 : vector<8x128xf32>
    %cst_58 = arith.constant 0.707106769 : f32
    %134 = vector.broadcast %cst_58 : f32 to vector<8x128xf32>
    %135 = arith.mulf %131, %134 : vector<8x128xf32>
    %136 = math.absf %135 : vector<8x128xf32>
    %cst_59 = arith.constant 0.327591091 : f32
    %137 = vector.broadcast %cst_59 : f32 to vector<8x128xf32>
    %138 = arith.mulf %137, %136 : vector<8x128xf32>
    %cst_60 = arith.constant 1.000000e+00 : f32
    %139 = vector.broadcast %cst_60 : f32 to vector<8x128xf32>
    %140 = arith.addf %139, %138 : vector<8x128xf32>
    %141 = tpu.reciprocal %140 {approx = true} : vector<8x128xf32> -> vector<8x128xf32>
    %cst_61 = arith.constant 1.06140542 : f32
    %142 = vector.broadcast %cst_61 : f32 to vector<8x128xf32>
    %143 = arith.mulf %142, %141 : vector<8x128xf32>
    %cst_62 = arith.constant -1.45315206 : f32
    %144 = vector.broadcast %cst_62 : f32 to vector<8x128xf32>
    %145 = arith.addf %143, %144 : vector<8x128xf32>
    %146 = arith.mulf %145, %141 : vector<8x128xf32>
    %cst_63 = arith.constant 1.42141378 : f32
    %147 = vector.broadcast %cst_63 : f32 to vector<8x128xf32>
    %148 = arith.addf %146, %147 : vector<8x128xf32>
    %149 = arith.mulf %148, %141 : vector<8x128xf32>
    %cst_64 = arith.constant -0.284496725 : f32
    %150 = vector.broadcast %cst_64 : f32 to vector<8x128xf32>
    %151 = arith.addf %149, %150 : vector<8x128xf32>
    %152 = arith.mulf %151, %141 : vector<8x128xf32>
    %cst_65 = arith.constant 0.254829586 : f32
    %153 = vector.broadcast %cst_65 : f32 to vector<8x128xf32>
    %154 = arith.addf %152, %153 : vector<8x128xf32>
    %155 = arith.mulf %154, %141 : vector<8x128xf32>
    %cst_66 = arith.constant 0.000000e+00 : f32
    %156 = vector.broadcast %cst_66 : f32 to vector<8x128xf32>
    %157 = arith.subf %156, %136 : vector<8x128xf32>
    %158 = arith.mulf %157, %136 : vector<8x128xf32>
    %159 = math.exp %158 : vector<8x128xf32>
    %160 = arith.mulf %155, %159 : vector<8x128xf32>
    %cst_67 = arith.constant 1.000000e+00 : f32
    %161 = vector.broadcast %cst_67 : f32 to vector<8x128xf32>
    %162 = arith.subf %161, %160 : vector<8x128xf32>
    %cst_68 = arith.constant 0.000000e+00 : f32
    %163 = vector.broadcast %cst_68 : f32 to vector<8x128xf32>
    %164 = arith.cmpf oge, %135, %163 : vector<8x128xf32>
    %cst_69 = arith.constant 0.000000e+00 : f32
    %165 = vector.broadcast %cst_69 : f32 to vector<8x128xf32>
    %166 = arith.subf %165, %162 : vector<8x128xf32>
    %167 = arith.select %164, %162, %166 : vector<8x128xi1>, vector<8x128xf32>
    %cst_70 = arith.constant 1.000000e+00 : f32
    %168 = vector.broadcast %cst_70 : f32 to vector<8x128xf32>
    %169 = arith.addf %168, %167 : vector<8x128xf32>
    %170 = arith.mulf %133, %169 : vector<8x128xf32>
    %c0_71 = arith.constant 0 : index
    %c0_72 = arith.constant 0 : index
    %171 = vector.load %arg5[%c0_71, %c0_72] : memref<128x512xf32, #tpu.memory_space<vmem>>, vector<128x512xf32>
    %cst_73 = arith.constant dense<0.000000e+00> : vector<8x512xf32>
    %172 = tpu.matmul %170, %171, %cst_73 {dimension_numbers = #tpu.dot_dimension_numbers<[1], [0], [0], [1], [0, 0, 1, 1], [], []>} : vector<8x128xf32>, vector<128x512xf32>, vector<8x512xf32> -> vector<8x512xf32>
    %c0_74 = arith.constant 0 : index
    %c0_75 = arith.constant 0 : index
    %173 = vector.load %arg6[%c0_74, %c0_75] : memref<1x512xf32, #tpu.memory_space<vmem>>, vector<1x512xf32>
    %174 = vector.broadcast %173 : vector<1x512xf32> to vector<8x512xf32>
    %175 = arith.addf %172, %174 : vector<8x512xf32>
    %cst_76 = arith.constant 5.000000e-01 : f32
    %176 = vector.broadcast %cst_76 : f32 to vector<8x512xf32>
    %177 = arith.mulf %176, %175 : vector<8x512xf32>
    %cst_77 = arith.constant 0.707106769 : f32
    %178 = vector.broadcast %cst_77 : f32 to vector<8x512xf32>
    %179 = arith.mulf %175, %178 : vector<8x512xf32>
    %180 = math.absf %179 : vector<8x512xf32>
    %cst_78 = arith.constant 0.327591091 : f32
    %181 = vector.broadcast %cst_78 : f32 to vector<8x512xf32>
    %182 = arith.mulf %181, %180 : vector<8x512xf32>
    %cst_79 = arith.constant 1.000000e+00 : f32
    %183 = vector.broadcast %cst_79 : f32 to vector<8x512xf32>
    %184 = arith.addf %183, %182 : vector<8x512xf32>
    %185 = tpu.reciprocal %184 {approx = true} : vector<8x512xf32> -> vector<8x512xf32>
    %cst_80 = arith.constant 1.06140542 : f32
    %186 = vector.broadcast %cst_80 : f32 to vector<8x512xf32>
    %187 = arith.mulf %186, %185 : vector<8x512xf32>
    %cst_81 = arith.constant -1.45315206 : f32
    %188 = vector.broadcast %cst_81 : f32 to vector<8x512xf32>
    %189 = arith.addf %187, %188 : vector<8x512xf32>
    %190 = arith.mulf %189, %185 : vector<8x512xf32>
    %cst_82 = arith.constant 1.42141378 : f32
    %191 = vector.broadcast %cst_82 : f32 to vector<8x512xf32>
    %192 = arith.addf %190, %191 : vector<8x512xf32>
    %193 = arith.mulf %192, %185 : vector<8x512xf32>
    %cst_83 = arith.constant -0.284496725 : f32
    %194 = vector.broadcast %cst_83 : f32 to vector<8x512xf32>
    %195 = arith.addf %193, %194 : vector<8x512xf32>
    %196 = arith.mulf %195, %185 : vector<8x512xf32>
    %cst_84 = arith.constant 0.254829586 : f32
    %197 = vector.broadcast %cst_84 : f32 to vector<8x512xf32>
    %198 = arith.addf %196, %197 : vector<8x512xf32>
    %199 = arith.mulf %198, %185 : vector<8x512xf32>
    %cst_85 = arith.constant 0.000000e+00 : f32
    %200 = vector.broadcast %cst_85 : f32 to vector<8x512xf32>
    %201 = arith.subf %200, %180 : vector<8x512xf32>
    %202 = arith.mulf %201, %180 : vector<8x512xf32>
    %203 = math.exp %202 : vector<8x512xf32>
    %204 = arith.mulf %199, %203 : vector<8x512xf32>
    %cst_86 = arith.constant 1.000000e+00 : f32
    %205 = vector.broadcast %cst_86 : f32 to vector<8x512xf32>
    %206 = arith.subf %205, %204 : vector<8x512xf32>
    %cst_87 = arith.constant 0.000000e+00 : f32
    %207 = vector.broadcast %cst_87 : f32 to vector<8x512xf32>
    %208 = arith.cmpf oge, %179, %207 : vector<8x512xf32>
    %cst_88 = arith.constant 0.000000e+00 : f32
    %209 = vector.broadcast %cst_88 : f32 to vector<8x512xf32>
    %210 = arith.subf %209, %206 : vector<8x512xf32>
    %211 = arith.select %208, %206, %210 : vector<8x512xi1>, vector<8x512xf32>
    %cst_89 = arith.constant 1.000000e+00 : f32
    %212 = vector.broadcast %cst_89 : f32 to vector<8x512xf32>
    %213 = arith.addf %212, %211 : vector<8x512xf32>
    %214 = arith.mulf %177, %213 : vector<8x512xf32>
    %c0_90 = arith.constant 0 : index
    %c0_91 = arith.constant 0 : index
    %215 = vector.load %arg7[%c0_90, %c0_91] : memref<512x128xf32, #tpu.memory_space<vmem>>, vector<512x128xf32>
    %cst_92 = arith.constant dense<0.000000e+00> : vector<8x128xf32>
    %216 = tpu.matmul %214, %215, %cst_92 {dimension_numbers = #tpu.dot_dimension_numbers<[1], [0], [0], [1], [0, 0, 1, 1], [], []>} : vector<8x512xf32>, vector<512x128xf32>, vector<8x128xf32> -> vector<8x128xf32>
    %c0_93 = arith.constant 0 : index
    %c0_94 = arith.constant 0 : index
    %217 = vector.load %arg8[%c0_93, %c0_94] : memref<1x128xf32, #tpu.memory_space<vmem>>, vector<1x128xf32>
    %218 = vector.broadcast %217 : vector<1x128xf32> to vector<8x128xf32>
    %219 = arith.addf %216, %218 : vector<8x128xf32>
    %c0_95 = arith.constant 0 : index
    %c0_96 = arith.constant 0 : index
    %220 = vector.load %arg9[%c0_95, %c0_96] : memref<8x128xf32, #tpu.memory_space<vmem>>, vector<8x128xf32>
    tpu.vector_store %arg9[%c0_95, %c0_96], %219 {strides = array<i32>} : memref<8x128xf32, #tpu.memory_space<vmem>>, vector<8x128xf32>,
    return
  }
  func.func @transform_0(%arg0: i32) -> (i32, i32) {
    %c0_i32 = arith.constant 0 : i32
    %c0_i32_0 = arith.constant 0 : i32
    return %arg0, %c0_i32 : i32, i32
  }
  func.func @transform_1(%arg0: i32) -> (i32, i32) {
    %c0_i32 = arith.constant 0 : i32
    %c0_i32_0 = arith.constant 0 : i32
    %c0_i32_1 = arith.constant 0 : i32
    return %c0_i32, %c0_i32_0 : i32, i32
  }
  func.func @transform_2(%arg0: i32) -> (i32, i32) {
    %c0_i32 = arith.constant 0 : i32
    %c0_i32_0 = arith.constant 0 : i32
    %c0_i32_1 = arith.constant 0 : i32
    return %c0_i32, %c0_i32_0 : i32, i32
  }
  func.func @transform_3(%arg0: i32) -> (i32, i32, i32) {
    %c0_i32 = arith.constant 0 : i32
    %c0_i32_0 = arith.constant 0 : i32
    %c0_i32_1 = arith.constant 0 : i32
    %c0_i32_2 = arith.constant 0 : i32
    return %c0_i32, %c0_i32_0, %c0_i32_1 : i32, i32, i32
  }
  func.func @transform_4(%arg0: i32) -> (i32, i32) {
    %c0_i32 = arith.constant 0 : i32
    %c0_i32_0 = arith.constant 0 : i32
    %c0_i32_1 = arith.constant 0 : i32
    return %c0_i32, %c0_i32_0 : i32, i32
  }
  func.func @transform_5(%arg0: i32) -> (i32, i32) {
    %c0_i32 = arith.constant 0 : i32
    %c0_i32_0 = arith.constant 0 : i32
    %c0_i32_1 = arith.constant 0 : i32
    return %c0_i32, %c0_i32_0 : i32, i32
  }
  func.func @transform_6(%arg0: i32) -> (i32, i32) {
    %c0_i32 = arith.constant 0 : i32
    %c0_i32_0 = arith.constant 0 : i32
    %c0_i32_1 = arith.constant 0 : i32
    return %c0_i32, %c0_i32_0 : i32, i32
  }
  func.func @transform_7(%arg0: i32) -> (i32, i32) {
    %c0_i32 = arith.constant 0 : i32
    %c0_i32_0 = arith.constant 0 : i32
    %c0_i32_1 = arith.constant 0 : i32
    return %c0_i32, %c0_i32_0 : i32, i32
  }
  func.func @transform_8(%arg0: i32) -> (i32, i32) {
    %c0_i32 = arith.constant 0 : i32
    %c0_i32_0 = arith.constant 0 : i32
    return %arg0, %c0_i32 : i32, i32
  }
}

</mosaic_0001>

<llo_original>
// kernel: tpu_custom_call.1
$region0: #{tpu_custom_call.1}
  #allocation0 [shape = 'u32[]', space=smem, size = 0x4, offset = 0x4, fixed_abs, tag = 'smem constant byte address 0x4 - core index']
  #allocation1 [shape = 'u32[72,128]{1,0:T(1,128)}', space=vmem, size = 0x9000, scoped, tag = 'internal scratch']
  %s0 = inlined_call_operand.hbm [shape: f32[8,128], index: 0, kind: input, shape index: {}]
  %s1 = inlined_call_operand.hbm [shape: f32[128,128], index: 1, kind: input, shape index: {}]
  %s2 = inlined_call_operand.hbm [shape: f32[1,128], index: 2, kind: input, shape index: {}]
  %s3 = inlined_call_operand.hbm [shape: f32[3,128,128], index: 3, kind: input, shape index: {}]
  %s4 = inlined_call_operand.hbm [shape: f32[128,512], index: 4, kind: input, shape index: {}]
  %s5 = inlined_call_operand.vmem [shape: f32[1,512], index: 5, kind: input, shape index: {}]
  %s6 = inlined_call_operand.hbm [shape: f32[512,128], index: 6, kind: input, shape index: {}]
  %s7 = inlined_call_operand.vmem [shape: f32[1,128], index: 7, kind: input, shape index: {}]
  %s8 = inlined_call_operand.hbm [shape: f32[8,128], index: 8, kind: output, shape index: {}]
  %s9 = sld [smem:[#allocation0]]
  $region66: #{tpu_custom_call.1} parent=0
    _
  %s11 = ssub.s32 1, %s9
  %s12 = scalar_select 0, %s11, %s9
  $region1: #{tpu_custom_call.1} parent=0
    #allocation2 [shape = 'u8[4096]{0}', space=vmem, size = 0x1000, scoped, tag = 'input window, operand 0, single buffered']
    #allocation3 [shape = 's32[1]{0}', space=sflag, size = 0x4, scoped, tag = 'scoped memory for tpu_custom_call.1']
    #allocation4 [shape = 's32[1]{0}', space=sflag, size = 0x4, scoped, tag = 'scoped memory for tpu_custom_call.1']
    #allocation5 [shape = 'u8[65536]{0}', space=vmem, size = 0x10000, scoped, tag = 'input window, operand 1, single buffered']
    #allocation6 [shape = 's32[1]{0}', space=sflag, size = 0x4, scoped, tag = 'scoped memory for tpu_custom_call.1']
    #allocation7 [shape = 'u8[512]{0}', space=vmem, size = 0x400, scoped, tag = 'input window, operand 2, single buffered']
    #allocation8 [shape = 'u8[196608]{0}', space=vmem, size = 0x30000, scoped, tag = 'input window, operand 3, single buffered']
    #allocation9 [shape = 's32[1]{0}', space=sflag, size = 0x4, scoped, tag = 'scoped memory for tpu_custom_call.1']
    #allocation10 [shape = 'u8[262144]{0}', space=vmem, size = 0x40000, scoped, tag = 'input window, operand 4, single buffered']
    #allocation11 [shape = 'u8[262144]{0}', space=vmem, size = 0x40000, scoped, tag = 'input window, operand 6, single buffered']
    #allocation12 [shape = 's32[1]{0}', space=sflag, size = 0x4, scoped, tag = 'scoped memory for tpu_custom_call.1']
    #allocation13 [shape = 'u8[4096]{0}', space=vmem, size = 0x1000, scoped, tag = 'output window, operand 0, single buffered']
    %13 = vsyncpa [#allocation3], 0
    %14 = vsyncpa [#allocation6], 0
    %15 = vsyncpa [#allocation9], 0
    %16 = vsyncpa [#allocation12], 0
    %17 = vsyncpa [#allocation4], 0
    // Predicated region
    $region2: #{tpu_custom_call.1} parent=1 // pred_check
      _
    $region3: #{tpu_custom_call.1} parent=1 // pred_check_branch
      %19 = sbr.rel (0) target = $region5
    $region4: #{tpu_custom_call.1} parent=1 // pred_region
      %21 = vsyncadd [#allocation3], 0
      %s23 = sshll.u32 %s0, 4
      %s24 = int_to_ptr.hbm [resolvable:$true] %s23
      %s25 = sshll.u32 [#allocation2], 4
      %s26 = int_to_ptr.vmem [resolvable:$true] %s25
      %28 = dma.hbm_to_vmem [thread:$0]  %s24, 128, %s26, [#allocation3]
    $region5: #{tpu_custom_call.1} parent=1 // pred_fallthru
      _
    // Predicated region
    $region6: #{tpu_custom_call.1} parent=1 // pred_check
      _
    $region7: #{tpu_custom_call.1} parent=1 // pred_check_branch
      %30 = sbr.rel (0) target = $region9
    $region8: #{tpu_custom_call.1} parent=1 // pred_region
      %32 = vsyncadd [#allocation6], 0
      %s33 = sshll.u32 %s1, 4
      %s34 = int_to_ptr.hbm [resolvable:$true] %s33
      %s35 = sshll.u32 [#allocation5], 4
      %s36 = int_to_ptr.vmem [resolvable:$true] %s35
      %41 = dma.hbm_to_vmem [thread:$0]  %s34, 2048, %s36, [#allocation6], 128, 128, 8
    $region9: #{tpu_custom_call.1} parent=1 // pred_fallthru
      _
    // Predicated region
    $region10: #{tpu_custom_call.1} parent=1 // pred_check
      _
    $region11: #{tpu_custom_call.1} parent=1 // pred_check_branch
      %43 = sbr.rel (0) target = $region13
    $region12: #{tpu_custom_call.1} parent=1 // pred_region
      %45 = vsyncadd [#allocation6], 0
      %s47 = sshll.u32 %s2, 4
      %s48 = int_to_ptr.hbm [resolvable:$true] %s47
      %s49 = sshll.u32 [#allocation7], 4
      %s50 = int_to_ptr.vmem [resolvable:$true] %s49
      %52 = dma.hbm_to_vmem [thread:$0]  %s48, 16, %s50, [#allocation6]
    $region13: #{tpu_custom_call.1} parent=1 // pred_fallthru
      _
    // Predicated region
    $region14: #{tpu_custom_call.1} parent=1 // pred_check
      _
    $region15: #{tpu_custom_call.1} parent=1 // pred_check_branch
      %54 = sbr.rel (0) target = $region17
    $region16: #{tpu_custom_call.1} parent=1 // pred_region
      %56 = vsyncadd [#allocation9], 0
      %s57 = sshll.u32 %s3, 4
      %s58 = int_to_ptr.hbm [resolvable:$true] %s57
      %s59 = sshll.u32 [#allocation8], 4
      %s60 = int_to_ptr.vmem [resolvable:$true] %s59
      %65 = dma.hbm_to_vmem [thread:$0]  %s58, 6144, %s60, [#allocation9], 128, 128, 8
    $region17: #{tpu_custom_call.1} parent=1 // pred_fallthru
      _
    // Predicated region
    $region18: #{tpu_custom_call.1} parent=1 // pred_check
      _
    $region19: #{tpu_custom_call.1} parent=1 // pred_check_branch
      %67 = sbr.rel (0) target = $region21
    $region20: #{tpu_custom_call.1} parent=1 // pred_region
      %69 = vsyncadd [#allocation9], 0
      %s70 = sshll.u32 %s4, 4
      %s71 = int_to_ptr.hbm [resolvable:$true] %s70
      %s72 = sshll.u32 [#allocation10], 4
      %s73 = int_to_ptr.vmem [resolvable:$true] %s72
      %78 = dma.hbm_to_vmem [thread:$0]  %s71, 8192, %s73, [#allocation9], 512, 512, 32
    $region21: #{tpu_custom_call.1} parent=1 // pred_fallthru
      _
    // Predicated region
    $region22: #{tpu_custom_call.1} parent=1 // pred_check
      _
    $region23: #{tpu_custom_call.1} parent=1 // pred_check_branch
      %80 = sbr.rel (0) target = $region25
    $region24: #{tpu_custom_call.1} parent=1 // pred_region
      _
    $region25: #{tpu_custom_call.1} parent=1 // pred_fallthru
      _
    // Predicated region
    $region26: #{tpu_custom_call.1} parent=1 // pred_check
      _
    $region27: #{tpu_custom_call.1} parent=1 // pred_check_branch
      %82 = sbr.rel (0) target = $region29
    $region28: #{tpu_custom_call.1} parent=1 // pred_region
      %84 = vsyncadd [#allocation12], 0
      %s85 = sshll.u32 %s6, 4
      %s86 = int_to_ptr.hbm [resolvable:$true] %s85
      %s87 = sshll.u32 [#allocation11], 4
      %s88 = int_to_ptr.vmem [resolvable:$true] %s87
      %93 = dma.hbm_to_vmem [thread:$0]  %s86, 8192, %s88, [#allocation12], 128, 128, 8
    $region29: #{tpu_custom_call.1} parent=1 // pred_fallthru
      _
    // Predicated region
    $region30: #{tpu_custom_call.1} parent=1 // pred_check
      _
    $region31: #{tpu_custom_call.1} parent=1 // pred_check_branch
      %95 = sbr.rel (0) target = $region33
    $region32: #{tpu_custom_call.1} parent=1 // pred_region
      _
    $region33: #{tpu_custom_call.1} parent=1 // pred_fallthru
      _
    // Predicated region
    $region34: #{tpu_custom_call.1} parent=1 // pred_check
      _
    $region35: #{tpu_custom_call.1} parent=1 // pred_check_branch
      %97 = sbr.rel (0) target = $region37
    $region36: #{tpu_custom_call.1} parent=1 // pred_region
      %99 = dma.done [#allocation3], 128
    $region37: #{tpu_custom_call.1} parent=1 // pred_fallthru
      _
    // Predicated region
    $region38: #{tpu_custom_call.1} parent=1 // pred_check
      _
    $region39: #{tpu_custom_call.1} parent=1 // pred_check_branch
      %101 = sbr.rel (0) target = $region41
    $region40: #{tpu_custom_call.1} parent=1 // pred_region
      %103 = dma.done [#allocation6], 2048
    $region41: #{tpu_custom_call.1} parent=1 // pred_fallthru
      _
    // Predicated region
    $region42: #{tpu_custom_call.1} parent=1 // pred_check
      _
    $region43: #{tpu_custom_call.1} parent=1 // pred_check_branch
      %105 = sbr.rel (0) target = $region45
    $region44: #{tpu_custom_call.1} parent=1 // pred_region
      %107 = dma.done [#allocation6], 16
    $region45: #{tpu_custom_call.1} parent=1 // pred_fallthru
      _
    // Predicated region
    $region46: #{tpu_custom_call.1} parent=1 // pred_check
      _
    $region47: #{tpu_custom_call.1} parent=1 // pred_check_branch
      %109 = sbr.rel (0) target = $region49
    $region48: #{tpu_custom_call.1} parent=1 // pred_region
      %111 = dma.done [#allocation9], 6144
    $region49: #{tpu_custom_call.1} parent=1 // pred_fallthru
      _
    // Predicated region
    $region50: #{tpu_custom_call.1} parent=1 // pred_check
      _
    $region51: #{tpu_custom_call.1} parent=1 // pred_check_branch
      %113 = sbr.rel (0) target = $region53
    $region52: #{tpu_custom_call.1} parent=1 // pred_region
      %115 = dma.done [#allocation9], 8192
    $region53: #{tpu_custom_call.1} parent=1 // pred_fallthru
      _
    // Predicated region
    $region54: #{tpu_custom_call.1} parent=1 // pred_check
      _
    $region55: #{tpu_custom_call.1} parent=1 // pred_check_branch
      %117 = sbr.rel (0) target = $region57
    $region56: #{tpu_custom_call.1} parent=1 // pred_region
      %119 = dma.done [#allocation12], 8192
    $region57: #{tpu_custom_call.1} parent=1 // pred_fallthru
      _
    %v120 = vld [vmem:[#allocation2] sm:$0xff]
    %v121 = vld [vmem:[#allocation5] sm:$0xff]
    %v122 = vld [vmem:[#allocation5 + $0x8] sm:$0xff]
    %v123 = vld [vmem:[#allocation5 + $0x10] sm:$0xff]
    %v124 = vld [vmem:[#allocation5 + $0x18] sm:$0xff]
    %v125 = vld [vmem:[#allocation5 + $0x20] sm:$0xff]
    %v126 = vld [vmem:[#allocation5 + $0x28] sm:$0xff]
    %v127 = vld [vmem:[#allocation5 + $0x30] sm:$0xff]
    %v128 = vld [vmem:[#allocation5 + $0x38] sm:$0xff]
    %v129 = vld [vmem:[#allocation5 + $0x40] sm:$0xff]
    %v130 = vld [vmem:[#allocation5 + $0x48] sm:$0xff]
    %v131 = vld [vmem:[#allocation5 + $0x50] sm:$0xff]
    %v132 = vld [vmem:[#allocation5 + $0x58] sm:$0xff]
    %v133 = vld [vmem:[#allocation5 + $0x60] sm:$0xff]
    %v134 = vld [vmem:[#allocation5 + $0x68] sm:$0xff]
    %v135 = vld [vmem:[#allocation5 + $0x70] sm:$0xff]
    %v136 = vld [vmem:[#allocation5 + $0x78] sm:$0xff]
    %v137 = vld [vmem:[#allocation7] sm:$0x1]
    %v139 = vperm.slane %v137, 0
    %141 = vmatpush.msra.mxu0 %v136
    %142 = vmatpush.msra.mxu0 %v135
    %143 = vmatpush.msra.mxu0 %v134
    %144 = vmatpush.msra.mxu0 %v133
    %145 = vmatpush.msra.mxu0 %v132
    %146 = vmatpush.msra.mxu0 %v131
    %147 = vmatpush.msra.mxu0 %v130
    %148 = vmatpush.msra.mxu0 %v129
    %149 = vmatpush.msra.mxu0 %v128
    %150 = vmatpush.msra.mxu0 %v127
    %151 = vmatpush.msra.mxu0 %v126
    %152 = vmatpush.msra.mxu0 %v125
    %153 = vmatpush.msra.mxu0 %v124
    %154 = vmatpush.msra.mxu0 %v123
    %155 = vmatpush.msra.mxu0 %v122
    %156 = vmatpush.msra.mxu0 %v121
    %157 = vmatmul.f32.gmra.mxu0 %v120
    %v158 = vpop.f32.mrf.mxu0
    %v159 = vadd.f32 %v139, %v158
    %160 = vdwg.mxu0
    %v161 = vmul.f32 %v159, 0.5
    %v162 = vmul.f32 %v159, 0.70710677
    %v163 = vand.u32 2147483647, %v162
    %v164 = vmul.f32 %v163, 0.3275911
    %v165 = vadd.f32 %v164, 1.0
    %v166 = vrcp.pop %v165
    %v167 = vmul.f32 %v166, 1.0614054
    %v168 = vadd.f32 %v167, -1.4531521
    %v169 = vmul.f32 %v168, %v166
    %v170 = vadd.f32 %v169, 1.4214138
    %v171 = vmul.f32 %v170, %v166
    %v172 = vadd.f32 %v171, -0.28449672
    %v173 = vmul.f32 %v172, %v166
    %v174 = vadd.f32 %v173, 0.2548296
    %v175 = vmul.f32 %v174, %v166
    %v176 = vsub.f32 0.0, %v163
    %v177 = vmul.f32 %v176, %v163
    %v178 = vmul.f32 %v177, 1.442695
    %v179 = vpow.pop %v178
    %v180 = vmul.f32 %v175, %v179
    %v181 = vsub.f32 1.0, %v180
    %vm182 = vcmp.ge.f32.partialorder %v162, 0.0
    %v183 = vsub.f32 0.0, %v181
    %v184 = vsel %vm182, %v181, %v183
    %v185 = vadd.f32 %v184, 1.0
    %v186 = vmul.f32 %v161, %v185
    %v187 = vld [vmem:[#allocation8] sm:$0xff]
    %v188 = vld [vmem:[#allocation8 + $0x8] sm:$0xff]
    %v189 = vld [vmem:[#allocation8 + $0x10] sm:$0xff]
    %v190 = vld [vmem:[#allocation8 + $0x18] sm:$0xff]
    %v191 = vld [vmem:[#allocation8 + $0x20] sm:$0xff]
    %v192 = vld [vmem:[#allocation8 + $0x28] sm:$0xff]
    %v193 = vld [vmem:[#allocation8 + $0x30] sm:$0xff]
    %v194 = vld [vmem:[#allocation8 + $0x38] sm:$0xff]
    %v195 = vld [vmem:[#allocation8 + $0x40] sm:$0xff]
    %v196 = vld [vmem:[#allocation8 + $0x48] sm:$0xff]
    %v197 = vld [vmem:[#allocation8 + $0x50] sm:$0xff]
    %v198 = vld [vmem:[#allocation8 + $0x58] sm:$0xff]
    %v199 = vld [vmem:[#allocation8 + $0x60] sm:$0xff]
    %v200 = vld [vmem:[#allocation8 + $0x68] sm:$0xff]
    %v201 = vld [vmem:[#allocation8 + $0x70] sm:$0xff]
    %v202 = vld [vmem:[#allocation8 + $0x78] sm:$0xff]
    %203 = vmatpush.msra.mxu0 %v202
    %204 = vmatpush.msra.mxu0 %v201
    %205 = vmatpush.msra.mxu0 %v200
    %206 = vmatpush.msra.mxu0 %v199
    %207 = vmatpush.msra.mxu0 %v198
    %208 = vmatpush.msra.mxu0 %v197
    %209 = vmatpush.msra.mxu0 %v196
    %210 = vmatpush.msra.mxu0 %v195
    %211 = vmatpush.msra.mxu0 %v194
    %212 = vmatpush.msra.mxu0 %v193
    %213 = vmatpush.msra.mxu0 %v192
    %214 = vmatpush.msra.mxu0 %v191
    %215 = vmatpush.msra.mxu0 %v190
    %216 = vmatpush.msra.mxu0 %v189
    %217 = vmatpush.msra.mxu0 %v188
    %218 = vmatpush.msra.mxu0 %v187
    %219 = vmatmul.f32.gmra.mxu0 %v186
    %v220 = vpop.f32.mrf.mxu0
    %v221 = vadd.f32 0.0, %v220
    %222 = vdwg.mxu0
    %v223 = vmul.f32 %v221, 0.5
    %v224 = vmul.f32 %v221, 0.70710677
    %v225 = vand.u32 2147483647, %v224
    %v226 = vmul.f32 %v225, 0.3275911
    %v227 = vadd.f32 %v226, 1.0
    %v228 = vrcp.pop %v227
    %v229 = vmul.f32 %v228, 1.0614054
    %v230 = vadd.f32 %v229, -1.4531521
    %v231 = vmul.f32 %v230, %v228
    %v232 = vadd.f32 %v231, 1.4214138
    %v233 = vmul.f32 %v232, %v228
    %v234 = vadd.f32 %v233, -0.28449672
    %v235 = vmul.f32 %v234, %v228
    %v236 = vadd.f32 %v235, 0.2548296
    %v237 = vmul.f32 %v236, %v228
    %v238 = vsub.f32 0.0, %v225
    %v239 = vmul.f32 %v238, %v225
    %v240 = vmul.f32 %v239, 1.442695
    %v241 = vpow.pop %v240
    %v242 = vmul.f32 %v237, %v241
    %v243 = vsub.f32 1.0, %v242
    %vm244 = vcmp.ge.f32.partialorder %v224, 0.0
    %v245 = vsub.f32 0.0, %v243
    %v246 = vsel %vm244, %v243, %v245
    %v247 = vadd.f32 %v246, 1.0
    %v248 = vmul.f32 %v223, %v247
    %s249 = scalar_lea.vmem [#allocation8], 128
    %v250 = vld [vmem:[%s249] sm:$0xff]
    %v251 = vld [vmem:[%s249 + $0x8] sm:$0xff]
    %v252 = vld [vmem:[%s249 + $0x10] sm:$0xff]
    %v253 = vld [vmem:[%s249 + $0x18] sm:$0xff]
    %v254 = vld [vmem:[%s249 + $0x20] sm:$0xff]
    %v255 = vld [vmem:[%s249 + $0x28] sm:$0xff]
    %v256 = vld [vmem:[%s249 + $0x30] sm:$0xff]
    %v257 = vld [vmem:[%s249 + $0x38] sm:$0xff]
    %v258 = vld [vmem:[%s249 + $0x40] sm:$0xff]
    %v259 = vld [vmem:[%s249 + $0x48] sm:$0xff]
    %v260 = vld [vmem:[%s249 + $0x50] sm:$0xff]
    %v261 = vld [vmem:[%s249 + $0x58] sm:$0xff]
    %v262 = vld [vmem:[%s249 + $0x60] sm:$0xff]
    %v263 = vld [vmem:[%s249 + $0x68] sm:$0xff]
    %v264 = vld [vmem:[%s249 + $0x70] sm:$0xff]
    %v265 = vld [vmem:[%s249 + $0x78] sm:$0xff]
    %266 = vmatpush.msra.mxu0 %v265
    %267 = vmatpush.msra.mxu0 %v264
    %268 = vmatpush.msra.mxu0 %v263
    %269 = vmatpush.msra.mxu0 %v262
    %270 = vmatpush.msra.mxu0 %v261
    %271 = vmatpush.msra.mxu0 %v260
    %272 = vmatpush.msra.mxu0 %v259
    %273 = vmatpush.msra.mxu0 %v258
    %274 = vmatpush.msra.mxu0 %v257
    %275 = vmatpush.msra.mxu0 %v256
    %276 = vmatpush.msra.mxu0 %v255
    %277 = vmatpush.msra.mxu0 %v254
    %278 = vmatpush.msra.mxu0 %v253
    %279 = vmatpush.msra.mxu0 %v252
    %280 = vmatpush.msra.mxu0 %v251
    %281 = vmatpush.msra.mxu0 %v250
    %282 = vmatmul.f32.gmra.mxu0 %v248
    %v283 = vpop.f32.mrf.mxu0
    %v284 = vadd.f32 0.0, %v283
    %285 = vdwg.mxu0
    %v286 = vmul.f32 %v284, 0.5
    %v287 = vmul.f32 %v284, 0.70710677
    %v288 = vand.u32 2147483647, %v287
    %v289 = vmul.f32 %v288, 0.3275911
    %v290 = vadd.f32 %v289, 1.0
    %v291 = vrcp.pop %v290
    %v292 = vmul.f32 %v291, 1.0614054
    %v293 = vadd.f32 %v292, -1.4531521
    %v294 = vmul.f32 %v293, %v291
    %v295 = vadd.f32 %v294, 1.4214138
    %v296 = vmul.f32 %v295, %v291
    %v297 = vadd.f32 %v296, -0.28449672
    %v298 = vmul.f32 %v297, %v291
    %v299 = vadd.f32 %v298, 0.2548296
    %v300 = vmul.f32 %v299, %v291
    %v301 = vsub.f32 0.0, %v288
    %v302 = vmul.f32 %v301, %v288
    %v303 = vmul.f32 %v302, 1.442695
    %v304 = vpow.pop %v303
    %v305 = vmul.f32 %v300, %v304
    %v306 = vsub.f32 1.0, %v305
    %vm307 = vcmp.ge.f32.partialorder %v287, 0.0
    %v308 = vsub.f32 0.0, %v306
    %v309 = vsel %vm307, %v306, %v308
    %v310 = vadd.f32 %v309, 1.0
    %v311 = vmul.f32 %v286, %v310
    %s312 = scalar_lea.vmem [#allocation8], 256
    %v313 = vld [vmem:[%s312] sm:$0xff]
    %v314 = vld [vmem:[%s312 + $0x8] sm:$0xff]
    %v315 = vld [vmem:[%s312 + $0x10] sm:$0xff]
    %v316 = vld [vmem:[%s312 + $0x18] sm:$0xff]
    %v317 = vld [vmem:[%s312 + $0x20] sm:$0xff]
    %v318 = vld [vmem:[%s312 + $0x28] sm:$0xff]
    %v319 = vld [vmem:[%s312 + $0x30] sm:$0xff]
    %v320 = vld [vmem:[%s312 + $0x38] sm:$0xff]
    %v321 = vld [vmem:[%s312 + $0x40] sm:$0xff]
    %v322 = vld [vmem:[%s312 + $0x48] sm:$0xff]
    %v323 = vld [vmem:[%s312 + $0x50] sm:$0xff]
    %v324 = vld [vmem:[%s312 + $0x58] sm:$0xff]
    %v325 = vld [vmem:[%s312 + $0x60] sm:$0xff]
    %v326 = vld [vmem:[%s312 + $0x68] sm:$0xff]
    %v327 = vld [vmem:[%s312 + $0x70] sm:$0xff]
    %v328 = vld [vmem:[%s312 + $0x78] sm:$0xff]
    %329 = vmatpush.msra.mxu0 %v328
    %330 = vmatpush.msra.mxu0 %v327
    %331 = vmatpush.msra.mxu0 %v326
    %332 = vmatpush.msra.mxu0 %v325
    %333 = vmatpush.msra.mxu0 %v324
    %334 = vmatpush.msra.mxu0 %v323
    %335 = vmatpush.msra.mxu0 %v322
    %336 = vmatpush.msra.mxu0 %v321
    %337 = vmatpush.msra.mxu0 %v320
    %338 = vmatpush.msra.mxu0 %v319
    %339 = vmatpush.msra.mxu0 %v318
    %340 = vmatpush.msra.mxu0 %v317
    %341 = vmatpush.msra.mxu0 %v316
    %342 = vmatpush.msra.mxu0 %v315
    %343 = vmatpush.msra.mxu0 %v314
    %344 = vmatpush.msra.mxu0 %v313
    %345 = vmatmul.f32.gmra.mxu0 %v311
    %v346 = vpop.f32.mrf.mxu0
    %v347 = vadd.f32 0.0, %v346
    %348 = vdwg.mxu0
    %v349 = vmul.f32 %v347, 0.5
    %v350 = vmul.f32 %v347, 0.70710677
    %v351 = vand.u32 2147483647, %v350
    %v352 = vmul.f32 %v351, 0.3275911
    %v353 = vadd.f32 %v352, 1.0
    %v354 = vrcp.pop %v353
    %v355 = vmul.f32 %v354, 1.0614054
    %v356 = vadd.f32 %v355, -1.4531521
    %v357 = vmul.f32 %v356, %v354
    %v358 = vadd.f32 %v357, 1.4214138
    %v359 = vmul.f32 %v358, %v354
    %v360 = vadd.f32 %v359, -0.28449672
    %v361 = vmul.f32 %v360, %v354
    %v362 = vadd.f32 %v361, 0.2548296
    %v363 = vmul.f32 %v362, %v354
    %v364 = vsub.f32 0.0, %v351
    %v365 = vmul.f32 %v364, %v351
    %v366 = vmul.f32 %v365, 1.442695
    %v367 = vpow.pop %v366
    %v368 = vmul.f32 %v363, %v367
    %v369 = vsub.f32 1.0, %v368
    %vm370 = vcmp.ge.f32.partialorder %v350, 0.0
    %v371 = vsub.f32 0.0, %v369
    %v372 = vsel %vm370, %v369, %v371
    %v373 = vadd.f32 %v372, 1.0
    %v374 = vmul.f32 %v349, %v373
    %v375 = vld [vmem:[#allocation10] sm:$0xff]
    %v376 = vld [vmem:[#allocation10 + $0x8] sm:$0xff]
    %v377 = vld [vmem:[#allocation10 + $0x10] sm:$0xff]
    %v378 = vld [vmem:[#allocation10 + $0x18] sm:$0xff]
    %v379 = vld [vmem:[#allocation10 + $0x20] sm:$0xff]
    %v380 = vld [vmem:[#allocation10 + $0x28] sm:$0xff]
    %v381 = vld [vmem:[#allocation10 + $0x30] sm:$0xff]
    %v382 = vld [vmem:[#allocation10 + $0x38] sm:$0xff]
    %v383 = vld [vmem:[#allocation10 + $0x40] sm:$0xff]
    %v384 = vld [vmem:[#allocation10 + $0x48] sm:$0xff]
    %v385 = vld [vmem:[#allocation10 + $0x50] sm:$0xff]
    %v386 = vld [vmem:[#allocation10 + $0x58] sm:$0xff]
    %v387 = vld [vmem:[#allocation10 + $0x60] sm:$0xff]
    %v388 = vld [vmem:[#allocation10 + $0x68] sm:$0xff]
    %v389 = vld [vmem:[#allocation10 + $0x70] sm:$0xff]
    %v390 = vld [vmem:[#allocation10 + $0x78] sm:$0xff]
    %v391 = vld [vmem:[#allocation10 + $0x80] sm:$0xff]
    %v392 = vld [vmem:[#allocation10 + $0x88] sm:$0xff]
    %v393 = vld [vmem:[#allocation10 + $0x90] sm:$0xff]
    %v394 = vld [vmem:[#allocation10 + $0x98] sm:$0xff]
    %v395 = vld [vmem:[#allocation10 + $0xa0] sm:$0xff]
    %v396 = vld [vmem:[#allocation10 + $0xa8] sm:$0xff]
    %v397 = vld [vmem:[#allocation10 + $0xb0] sm:$0xff]
    %v398 = vld [vmem:[#allocation10 + $0xb8] sm:$0xff]
    %v399 = vld [vmem:[#allocation10 + $0xc0] sm:$0xff]
    %v400 = vld [vmem:[#allocation10 + $0xc8] sm:$0xff]
    %v401 = vld [vmem:[#allocation10 + $0xd0] sm:$0xff]
    %v402 = vld [vmem:[#allocation10 + $0xd8] sm:$0xff]
    %v403 = vld [vmem:[#allocation10 + $0xe0] sm:$0xff]
    %v404 = vld [vmem:[#allocation10 + $0xe8] sm:$0xff]
    %v405 = vld [vmem:[#allocation10 + $0xf0] sm:$0xff]
    %v406 = vld [vmem:[#allocation10 + $0xf8] sm:$0xff]
    %v407 = vld [vmem:[#allocation10 + $0x100] sm:$0xff]
    %v408 = vld [vmem:[#allocation10 + $0x108] sm:$0xff]
    %v409 = vld [vmem:[#allocation10 + $0x110] sm:$0xff]
    %v410 = vld [vmem:[#allocation10 + $0x118] sm:$0xff]
    %v411 = vld [vmem:[#allocation10 + $0x120] sm:$0xff]
    %v412 = vld [vmem:[#allocation10 + $0x128] sm:$0xff]
    %v413 = vld [vmem:[#allocation10 + $0x130] sm:$0xff]
    %v414 = vld [vmem:[#allocation10 + $0x138] sm:$0xff]
    %v415 = vld [vmem:[#allocation10 + $0x140] sm:$0xff]
    %v416 = vld [vmem:[#allocation10 + $0x148] sm:$0xff]
    %v417 = vld [vmem:[#allocation10 + $0x150] sm:$0xff]
    %v418 = vld [vmem:[#allocation10 + $0x158] sm:$0xff]
    %v419 = vld [vmem:[#allocation10 + $0x160] sm:$0xff]
    %v420 = vld [vmem:[#allocation10 + $0x168] sm:$0xff]
    %v421 = vld [vmem:[#allocation10 + $0x170] sm:$0xff]
    %v422 = vld [vmem:[#allocation10 + $0x178] sm:$0xff]
    %v423 = vld [vmem:[#allocation10 + $0x180] sm:$0xff]
    %v424 = vld [vmem:[#allocation10 + $0x188] sm:$0xff]
    %v425 = vld [vmem:[#allocation10 + $0x190] sm:$0xff]
    %v426 = vld [vmem:[#allocation10 + $0x198] sm:$0xff]
    %v427 = vld [vmem:[#allocation10 + $0x1a0] sm:$0xff]
    %v428 = vld [vmem:[#allocation10 + $0x1a8] sm:$0xff]
    %v429 = vld [vmem:[#allocation10 + $0x1b0] sm:$0xff]
    %v430 = vld [vmem:[#allocation10 + $0x1b8] sm:$0xff]
    %v431 = vld [vmem:[#allocation10 + $0x1c0] sm:$0xff]
    %v432 = vld [vmem:[#allocation10 + $0x1c8] sm:$0xff]
    %v433 = vld [vmem:[#allocation10 + $0x1d0] sm:$0xff]
    %v434 = vld [vmem:[#allocation10 + $0x1d8] sm:$0xff]
    %v435 = vld [vmem:[#allocation10 + $0x1e0] sm:$0xff]
    %v436 = vld [vmem:[#allocation10 + $0x1e8] sm:$0xff]
    %v437 = vld [vmem:[#allocation10 + $0x1f0] sm:$0xff]
    %v438 = vld [vmem:[#allocation10 + $0x1f8] sm:$0xff]
    %v439 = vld [vmem:[%s5] sm:$0xf]
    %v441 = vperm.slane %v439, 0
    %v442 = vperm.slane %v439, 1
    %v443 = vperm.slane %v439, 2
    %v444 = vperm.slane %v439, 3
    %449 = vmatpush.msra.mxu0 %v435
    %450 = vmatpush.msra.mxu0 %v431
    %451 = vmatpush.msra.mxu0 %v427
    %452 = vmatpush.msra.mxu0 %v423
    %453 = vmatpush.msra.mxu0 %v419
    %454 = vmatpush.msra.mxu0 %v415
    %455 = vmatpush.msra.mxu0 %v411
    %456 = vmatpush.msra.mxu0 %v407
    %457 = vmatpush.msra.mxu0 %v403
    %458 = vmatpush.msra.mxu0 %v399
    %459 = vmatpush.msra.mxu0 %v395
    %460 = vmatpush.msra.mxu0 %v391
    %461 = vmatpush.msra.mxu0 %v387
    %462 = vmatpush.msra.mxu0 %v383
    %463 = vmatpush.msra.mxu0 %v379
    %464 = vmatpush.msra.mxu0 %v375
    %465 = vmatmul.f32.gmra.mxu0 %v374
    %v466 = vpop.f32.mrf.mxu0
    %v467 = vadd.f32 %v441, %v466
    %468 = vdwg.mxu0
    %469 = vmatpush.msra.mxu0 %v436
    %470 = vmatpush.msra.mxu0 %v432
    %471 = vmatpush.msra.mxu0 %v428
    %472 = vmatpush.msra.mxu0 %v424
    %473 = vmatpush.msra.mxu0 %v420
    %474 = vmatpush.msra.mxu0 %v416
    %475 = vmatpush.msra.mxu0 %v412
    %476 = vmatpush.msra.mxu0 %v408
    %477 = vmatpush.msra.mxu0 %v404
    %478 = vmatpush.msra.mxu0 %v400
    %479 = vmatpush.msra.mxu0 %v396
    %480 = vmatpush.msra.mxu0 %v392
    %481 = vmatpush.msra.mxu0 %v388
    %482 = vmatpush.msra.mxu0 %v384
    %483 = vmatpush.msra.mxu0 %v380
    %484 = vmatpush.msra.mxu0 %v376
    %485 = vmatmul.f32.gmra.mxu0 %v374
    %v486 = vpop.f32.mrf.mxu0
    %v487 = vadd.f32 %v442, %v486
    %488 = vdwg.mxu0
    %489 = vmatpush.msra.mxu0 %v437
    %490 = vmatpush.msra.mxu0 %v433
    %491 = vmatpush.msra.mxu0 %v429
    %492 = vmatpush.msra.mxu0 %v425
    %493 = vmatpush.msra.mxu0 %v421
    %494 = vmatpush.msra.mxu0 %v417
    %495 = vmatpush.msra.mxu0 %v413
    %496 = vmatpush.msra.mxu0 %v409
    %497 = vmatpush.msra.mxu0 %v405
    %498 = vmatpush.msra.mxu0 %v401
    %499 = vmatpush.msra.mxu0 %v397
    %500 = vmatpush.msra.mxu0 %v393
    %501 = vmatpush.msra.mxu0 %v389
    %502 = vmatpush.msra.mxu0 %v385
    %503 = vmatpush.msra.mxu0 %v381
    %504 = vmatpush.msra.mxu0 %v377
    %505 = vmatmul.f32.gmra.mxu0 %v374
    %v506 = vpop.f32.mrf.mxu0
    %v507 = vadd.f32 %v443, %v506
    %508 = vdwg.mxu0
    %509 = vmatpush.msra.mxu0 %v438
    %510 = vmatpush.msra.mxu0 %v434
    %511 = vmatpush.msra.mxu0 %v430
    %512 = vmatpush.msra.mxu0 %v426
    %513 = vmatpush.msra.mxu0 %v422
    %514 = vmatpush.msra.mxu0 %v418
    %515 = vmatpush.msra.mxu0 %v414
    %516 = vmatpush.msra.mxu0 %v410
    %517 = vmatpush.msra.mxu0 %v406
    %518 = vmatpush.msra.mxu0 %v402
    %519 = vmatpush.msra.mxu0 %v398
    %520 = vmatpush.msra.mxu0 %v394
    %521 = vmatpush.msra.mxu0 %v390
    %522 = vmatpush.msra.mxu0 %v386
    %523 = vmatpush.msra.mxu0 %v382
    %524 = vmatpush.msra.mxu0 %v378
    %525 = vmatmul.f32.gmra.mxu0 %v374
    %v526 = vpop.f32.mrf.mxu0
    %v527 = vadd.f32 %v444, %v526
    %528 = vdwg.mxu0
    %v529 = vmul.f32 %v467, 0.5
    %v530 = vmul.f32 %v487, 0.5
    %v531 = vmul.f32 %v507, 0.5
    %v532 = vmul.f32 %v527, 0.5
    %v533 = vmul.f32 %v467, 0.70710677
    %v534 = vmul.f32 %v487, 0.70710677
    %v535 = vmul.f32 %v507, 0.70710677
    %v536 = vmul.f32 %v527, 0.70710677
    %v537 = vand.u32 2147483647, %v533
    %v538 = vand.u32 2147483647, %v534
    %v539 = vand.u32 2147483647, %v535
    %v540 = vand.u32 2147483647, %v536
    %v541 = vmul.f32 %v537, 0.3275911
    %v542 = vmul.f32 %v538, 0.3275911
    %v543 = vmul.f32 %v539, 0.3275911
    %v544 = vmul.f32 %v540, 0.3275911
    %v545 = vadd.f32 %v541, 1.0
    %v546 = vadd.f32 %v542, 1.0
    %v547 = vadd.f32 %v543, 1.0
    %v548 = vadd.f32 %v544, 1.0
    %v549 = vrcp.pop %v545
    %v550 = vrcp.pop %v546
    %v551 = vrcp.pop %v547
    %v552 = vrcp.pop %v548
    %v553 = vmul.f32 %v549, 1.0614054
    %v554 = vmul.f32 %v550, 1.0614054
    %v555 = vmul.f32 %v551, 1.0614054
    %v556 = vmul.f32 %v552, 1.0614054
    %v557 = vadd.f32 %v553, -1.4531521
    %v558 = vadd.f32 %v554, -1.4531521
    %v559 = vadd.f32 %v555, -1.4531521
    %v560 = vadd.f32 %v556, -1.4531521
    %v561 = vmul.f32 %v557, %v549
    %v562 = vmul.f32 %v558, %v550
    %v563 = vmul.f32 %v559, %v551
    %v564 = vmul.f32 %v560, %v552
    %v565 = vadd.f32 %v561, 1.4214138
    %v566 = vadd.f32 %v562, 1.4214138
    %v567 = vadd.f32 %v563, 1.4214138
    %v568 = vadd.f32 %v564, 1.4214138
    %v569 = vmul.f32 %v565, %v549
    %v570 = vmul.f32 %v566, %v550
    %v571 = vmul.f32 %v567, %v551
    %v572 = vmul.f32 %v568, %v552
    %v573 = vadd.f32 %v569, -0.28449672
    %v574 = vadd.f32 %v570, -0.28449672
    %v575 = vadd.f32 %v571, -0.28449672
    %v576 = vadd.f32 %v572, -0.28449672
    %v577 = vmul.f32 %v573, %v549
    %v578 = vmul.f32 %v574, %v550
    %v579 = vmul.f32 %v575, %v551
    %v580 = vmul.f32 %v576, %v552
    %v581 = vadd.f32 %v577, 0.2548296
    %v582 = vadd.f32 %v578, 0.2548296
    %v583 = vadd.f32 %v579, 0.2548296
    %v584 = vadd.f32 %v580, 0.2548296
    %v585 = vmul.f32 %v581, %v549
    %v586 = vmul.f32 %v582, %v550
    %v587 = vmul.f32 %v583, %v551
    %v588 = vmul.f32 %v584, %v552
    %v589 = vsub.f32 0.0, %v537
    %v590 = vsub.f32 0.0, %v538
    %v591 = vsub.f32 0.0, %v539
    %v592 = vsub.f32 0.0, %v540
    %v593 = vmul.f32 %v589, %v537
    %v594 = vmul.f32 %v590, %v538
    %v595 = vmul.f32 %v591, %v539
    %v596 = vmul.f32 %v592, %v540
    %v597 = vmul.f32 %v593, 1.442695
    %v598 = vpow.pop %v597
    %v599 = vmul.f32 %v594, 1.442695
    %v600 = vpow.pop %v599
    %v601 = vmul.f32 %v595, 1.442695
    %v602 = vpow.pop %v601
    %v603 = vmul.f32 %v596, 1.442695
    %v604 = vpow.pop %v603
    %v605 = vmul.f32 %v585, %v598
    %v606 = vmul.f32 %v586, %v600
    %v607 = vmul.f32 %v587, %v602
    %v608 = vmul.f32 %v588, %v604
    %v609 = vsub.f32 1.0, %v605
    %v610 = vsub.f32 1.0, %v606
    %v611 = vsub.f32 1.0, %v607
    %v612 = vsub.f32 1.0, %v608
    %vm613 = vcmp.ge.f32.partialorder %v533, 0.0
    %vm614 = vcmp.ge.f32.partialorder %v534, 0.0
    %vm615 = vcmp.ge.f32.partialorder %v535, 0.0
    %vm616 = vcmp.ge.f32.partialorder %v536, 0.0
    %v617 = vsub.f32 0.0, %v609
    %v618 = vsub.f32 0.0, %v610
    %v619 = vsub.f32 0.0, %v611
    %v620 = vsub.f32 0.0, %v612
    %v621 = vsel %vm613, %v609, %v617
    %v622 = vsel %vm614, %v610, %v618
    %v623 = vsel %vm615, %v611, %v619
    %v624 = vsel %vm616, %v612, %v620
    %v625 = vadd.f32 %v621, 1.0
    %v626 = vadd.f32 %v622, 1.0
    %v627 = vadd.f32 %v623, 1.0
    %v628 = vadd.f32 %v624, 1.0
    %v629 = vmul.f32 %v529, %v625
    %v630 = vmul.f32 %v530, %v626
    %v631 = vmul.f32 %v531, %v627
    %v632 = vmul.f32 %v532, %v628
    %v633 = vld [vmem:[#allocation11] sm:$0xff]
    %v634 = vld [vmem:[#allocation11 + $0x8] sm:$0xff]
    %v635 = vld [vmem:[#allocation11 + $0x10] sm:$0xff]
    %v636 = vld [vmem:[#allocation11 + $0x18] sm:$0xff]
    %v637 = vld [vmem:[#allocation11 + $0x20] sm:$0xff]
    %v638 = vld [vmem:[#allocation11 + $0x28] sm:$0xff]
    %v639 = vld [vmem:[#allocation11 + $0x30] sm:$0xff]
    %v640 = vld [vmem:[#allocation11 + $0x38] sm:$0xff]
    %v641 = vld [vmem:[#allocation11 + $0x40] sm:$0xff]
    %v642 = vld [vmem:[#allocation11 + $0x48] sm:$0xff]
    %v643 = vld [vmem:[#allocation11 + $0x50] sm:$0xff]
    %v644 = vld [vmem:[#allocation11 + $0x58] sm:$0xff]
    %v645 = vld [vmem:[#allocation11 + $0x60] sm:$0xff]
    %v646 = vld [vmem:[#allocation11 + $0x68] sm:$0xff]
    %v647 = vld [vmem:[#allocation11 + $0x70] sm:$0xff]
    %v648 = vld [vmem:[#allocation11 + $0x78] sm:$0xff]
    %v649 = vld [vmem:[#allocation11 + $0x80] sm:$0xff]
    %v650 = vld [vmem:[#allocation11 + $0x88] sm:$0xff]
    %v651 = vld [vmem:[#allocation11 + $0x90] sm:$0xff]
    %v652 = vld [vmem:[#allocation11 + $0x98] sm:$0xff]
    %v653 = vld [vmem:[#allocation11 + $0xa0] sm:$0xff]
    %v654 = vld [vmem:[#allocation11 + $0xa8] sm:$0xff]
    %v655 = vld [vmem:[#allocation11 + $0xb0] sm:$0xff]
    %v656 = vld [vmem:[#allocation11 + $0xb8] sm:$0xff]
    %v657 = vld [vmem:[#allocation11 + $0xc0] sm:$0xff]
    %v658 = vld [vmem:[#allocation11 + $0xc8] sm:$0xff]
    %v659 = vld [vmem:[#allocation11 + $0xd0] sm:$0xff]
    %v660 = vld [vmem:[#allocation11 + $0xd8] sm:$0xff]
    %v661 = vld [vmem:[#allocation11 + $0xe0] sm:$0xff]
    %v662 = vld [vmem:[#allocation11 + $0xe8] sm:$0xff]
    %v663 = vld [vmem:[#allocation11 + $0xf0] sm:$0xff]
    %v664 = vld [vmem:[#allocation11 + $0xf8] sm:$0xff]
    %v665 = vld [vmem:[#allocation11 + $0x100] sm:$0xff]
    %v666 = vld [vmem:[#allocation11 + $0x108] sm:$0xff]
    %v667 = vld [vmem:[#allocation11 + $0x110] sm:$0xff]
    %v668 = vld [vmem:[#allocation11 + $0x118] sm:$0xff]
    %v669 = vld [vmem:[#allocation11 + $0x120] sm:$0xff]
    %v670 = vld [vmem:[#allocation11 + $0x128] sm:$0xff]
    %v671 = vld [vmem:[#allocation11 + $0x130] sm:$0xff]
    %v672 = vld [vmem:[#allocation11 + $0x138] sm:$0xff]
    %v673 = vld [vmem:[#allocation11 + $0x140] sm:$0xff]
    %v674 = vld [vmem:[#allocation11 + $0x148] sm:$0xff]
    %v675 = vld [vmem:[#allocation11 + $0x150] sm:$0xff]
    %v676 = vld [vmem:[#allocation11 + $0x158] sm:$0xff]
    %v677 = vld [vmem:[#allocation11 + $0x160] sm:$0xff]
    %v678 = vld [vmem:[#allocation11 + $0x168] sm:$0xff]
    %v679 = vld [vmem:[#allocation11 + $0x170] sm:$0xff]
    %v680 = vld [vmem:[#allocation11 + $0x178] sm:$0xff]
    %v681 = vld [vmem:[#allocation11 + $0x180] sm:$0xff]
    %v682 = vld [vmem:[#allocation11 + $0x188] sm:$0xff]
    %v683 = vld [vmem:[#allocation11 + $0x190] sm:$0xff]
    %v684 = vld [vmem:[#allocation11 + $0x198] sm:$0xff]
    %v685 = vld [vmem:[#allocation11 + $0x1a0] sm:$0xff]
    %v686 = vld [vmem:[#allocation11 + $0x1a8] sm:$0xff]
    %v687 = vld [vmem:[#allocation11 + $0x1b0] sm:$0xff]
    %v688 = vld [vmem:[#allocation11 + $0x1b8] sm:$0xff]
    %v689 = vld [vmem:[#allocation11 + $0x1c0] sm:$0xff]
    %v690 = vld [vmem:[#allocation11 + $0x1c8] sm:$0xff]
    %v691 = vld [vmem:[#allocation11 + $0x1d0] sm:$0xff]
    %v692 = vld [vmem:[#allocation11 + $0x1d8] sm:$0xff]
    %v693 = vld [vmem:[#allocation11 + $0x1e0] sm:$0xff]
    %v694 = vld [vmem:[#allocation11 + $0x1e8] sm:$0xff]
    %v695 = vld [vmem:[#allocation11 + $0x1f0] sm:$0xff]
    %v696 = vld [vmem:[#allocation11 + $0x1f8] sm:$0xff]
    %v697 = vld [vmem:[%s7] sm:$0x1]
    %v699 = vperm.slane %v697, 0
    %701 = vmatpush.msra.mxu0 %v648
    %702 = vmatpush.msra.mxu0 %v647
    %703 = vmatpush.msra.mxu0 %v646
    %704 = vmatpush.msra.mxu0 %v645
    %705 = vmatpush.msra.mxu0 %v644
    %706 = vmatpush.msra.mxu0 %v643
    %707 = vmatpush.msra.mxu0 %v642
    %708 = vmatpush.msra.mxu0 %v641
    %709 = vmatpush.msra.mxu0 %v640
    %710 = vmatpush.msra.mxu0 %v639
    %711 = vmatpush.msra.mxu0 %v638
    %712 = vmatpush.msra.mxu0 %v637
    %713 = vmatpush.msra.mxu0 %v636
    %714 = vmatpush.msra.mxu0 %v635
    %715 = vmatpush.msra.mxu0 %v634
    %716 = vmatpush.msra.mxu0 %v633
    %717 = vmatmul.f32.gmra.mxu0 %v629
    %v718 = vpop.f32.mrf.mxu0
    %v719 = vadd.f32 %v699, %v718
    %720 = vdwg.mxu0
    %721 = vmatpush.msra.mxu0 %v664
    %722 = vmatpush.msra.mxu0 %v663
    %723 = vmatpush.msra.mxu0 %v662
    %724 = vmatpush.msra.mxu0 %v661
    %725 = vmatpush.msra.mxu0 %v660
    %726 = vmatpush.msra.mxu0 %v659
    %727 = vmatpush.msra.mxu0 %v658
    %728 = vmatpush.msra.mxu0 %v657
    %729 = vmatpush.msra.mxu0 %v656
    %730 = vmatpush.msra.mxu0 %v655
    %731 = vmatpush.msra.mxu0 %v654
    %732 = vmatpush.msra.mxu0 %v653
    %733 = vmatpush.msra.mxu0 %v652
    %734 = vmatpush.msra.mxu0 %v651
    %735 = vmatpush.msra.mxu0 %v650
    %736 = vmatpush.msra.mxu0 %v649
    %737 = vmatmul.f32.gmra.mxu0 %v630
    %v738 = vpop.f32.mrf.mxu0
    %v739 = vadd.f32 %v719, %v738
    %740 = vdwg.mxu0
    %741 = vmatpush.msra.mxu0 %v680
    %742 = vmatpush.msra.mxu0 %v679
    %743 = vmatpush.msra.mxu0 %v678
    %744 = vmatpush.msra.mxu0 %v677
    %745 = vmatpush.msra.mxu0 %v676
    %746 = vmatpush.msra.mxu0 %v675
    %747 = vmatpush.msra.mxu0 %v674
    %748 = vmatpush.msra.mxu0 %v673
    %749 = vmatpush.msra.mxu0 %v672
    %750 = vmatpush.msra.mxu0 %v671
    %751 = vmatpush.msra.mxu0 %v670
    %752 = vmatpush.msra.mxu0 %v669
    %753 = vmatpush.msra.mxu0 %v668
    %754 = vmatpush.msra.mxu0 %v667
    %755 = vmatpush.msra.mxu0 %v666
    %756 = vmatpush.msra.mxu0 %v665
    %757 = vmatmul.f32.gmra.mxu0 %v631
    %v758 = vpop.f32.mrf.mxu0
    %v759 = vadd.f32 %v739, %v758
    %760 = vdwg.mxu0
    %761 = vmatpush.msra.mxu0 %v696
    %762 = vmatpush.msra.mxu0 %v695
    %763 = vmatpush.msra.mxu0 %v694
    %764 = vmatpush.msra.mxu0 %v693
    %765 = vmatpush.msra.mxu0 %v692
    %766 = vmatpush.msra.mxu0 %v691
    %767 = vmatpush.msra.mxu0 %v690
    %768 = vmatpush.msra.mxu0 %v689
    %769 = vmatpush.msra.mxu0 %v688
    %770 = vmatpush.msra.mxu0 %v687
    %771 = vmatpush.msra.mxu0 %v686
    %772 = vmatpush.msra.mxu0 %v685
    %773 = vmatpush.msra.mxu0 %v684
    %774 = vmatpush.msra.mxu0 %v683
    %775 = vmatpush.msra.mxu0 %v682
    %776 = vmatpush.msra.mxu0 %v681
    %777 = vmatmul.f32.gmra.mxu0 %v632
    %v778 = vpop.f32.mrf.mxu0
    %v779 = vadd.f32 %v759, %v778
    %780 = vdwg.mxu0
    %781 = vst [vmem:[#allocation13] sm:$0xff] %v779
    // Predicated region
    $region58: #{tpu_custom_call.1} parent=1 // pred_check
      _
    $region59: #{tpu_custom_call.1} parent=1 // pred_check_branch
      %783 = sbr.rel (0) target = $region61
    $region60: #{tpu_custom_call.1} parent=1 // pred_region
      %785 = vsyncadd [#allocation4], 0
      %s787 = sshll.u32 [#allocation13], 4
      %s788 = int_to_ptr.vmem [resolvable:$true] %s787
      %s789 = sshll.u32 %s8, 4
      %s790 = int_to_ptr.hbm [resolvable:$true] %s789
      %792 = dma.vmem_to_hbm [thread:$0]  %s788, 128, %s790, [#allocation4]
    $region61: #{tpu_custom_call.1} parent=1 // pred_fallthru
      _
    // Predicated region
    $region62: #{tpu_custom_call.1} parent=1 // pred_check
      _
    $region63: #{tpu_custom_call.1} parent=1 // pred_check_branch
      %794 = sbr.rel (0) target = $region65
    $region64: #{tpu_custom_call.1} parent=1 // pred_region
      %796 = dma.done [#allocation4], 128
    $region65: #{tpu_custom_call.1} parent=1 // pred_fallthru
      _
    %797 = vsyncpa [#allocation3], 1
    %798 = vsyncpa [#allocation6], 1
    %799 = vsyncpa [#allocation9], 1
    %800 = vsyncpa [#allocation12], 1
    %801 = vsyncpa [#allocation4], 1

</llo_original>
